<compile_context>
chip_gen: v7x
topology: tpu7x:2x2x1
jax: 0.10.0
libtpu: 0.0.40
codegen_flags: <defaults>
</compile_context>

<pallas_src>
import jax
import jax.numpy as jnp
from jax.experimental import pallas as pl
from jax.experimental.pallas import tpu as pltpu

N_NODES = 14  # fixed by GCN.forward: x = x.view(1, 14, -1)


def _graph_conv_kernel(x_ref, w_ref, a_ref, b_ref, o_ref):
    """out = relu(a' @ (x @ W)) + b, with a' = a + I when a[0, 0] == 0.

    x_ref : (N, F)   node features
    w_ref : (F, P)   GraphConv weight
    a_ref : (N, N)   adjacency matrix
    b_ref : (1, P)   GraphConv bias (added AFTER the activation, per the spec)
    o_ref : (N, P)
    """
    n = a_ref.shape[0]
    a = a_ref[...].astype(jnp.float32)

    # GraphConv.forward: if a[0, 0] == 0: a += I   (add self-loops)
    row = jax.lax.broadcasted_iota(jnp.int32, (n, n), 0)
    col = jax.lax.broadcasted_iota(jnp.int32, (n, n), 1)
    eye = (row == col).astype(jnp.float32)
    needs_self_loops = a_ref[0:1, 0:1].astype(jnp.float32) == 0.0   # (1, 1) bool
    a = jnp.where(needs_self_loops, a + eye, a)

    xw = jnp.dot(x_ref[...].astype(jnp.float32),
                 w_ref[...].astype(jnp.float32),
                 preferred_element_type=jnp.float32)                 # (N, P)
    ax = jnp.dot(a, xw, preferred_element_type=jnp.float32)          # (N, P)

    o_ref[...] = (jnp.maximum(ax, 0.0)
                  + b_ref[...].astype(jnp.float32)).astype(o_ref.dtype)


def _fc_kernel(x_ref, w_ref, b_ref, o_ref):
    """Predict head: out = x @ W^T + b   (nn.Linear(14*P, 14), W pre-transposed)."""
    o_ref[...] = (jnp.dot(x_ref[...], w_ref[...],
                          preferred_element_type=jnp.float32)
                  + b_ref[...]).astype(o_ref.dtype)


@jax.jit
def graph_conv_forward(x, adj, weight, bias):
    """GraphConv / GCN(predict=False) forward.

    x      : any shape with 14*F elements (torch does x.view(1, 14, -1))
    adj    : (14, 14)
    weight : (F, P), bias : (P,)
    returns (1, 14, P)
    """
    n = N_NODES
    x2d = x.reshape(n, -1).astype(jnp.float32)           # (14, F)
    f_dim = x2d.shape[1]
    p_dim = weight.shape[1]
    a = adj.astype(jnp.float32)
    w = weight.astype(jnp.float32)
    b = bias.reshape(1, p_dim).astype(jnp.float32)

    grid_spec = pltpu.PrefetchScalarGridSpec(
        num_scalar_prefetch=0,
        grid=(1,),                                        # single fused invocation
        in_specs=[
            pl.BlockSpec((n, f_dim), lambda i: (0, 0)),   # x
            pl.BlockSpec((f_dim, p_dim), lambda i: (0, 0)),  # W
            pl.BlockSpec((n, n), lambda i: (0, 0)),       # adjacency
            pl.BlockSpec((1, p_dim), lambda i: (0, 0)),   # bias
        ],
        out_specs=pl.BlockSpec((n, p_dim), lambda i: (0, 0)),
    )

    out = pl.pallas_call(
        _graph_conv_kernel,
        out_shape=jax.ShapeDtypeStruct((n, p_dim), jnp.float32),
        grid_spec=grid_spec,
        compiler_params=pltpu.CompilerParams(
            dimension_semantics=("arbitrary",)),
    )(x2d, w, a, b)

    return out[None, ...]                                 # (1, 14, P), torch layout


@jax.jit
def _fc_forward(x_flat, fc_weight, fc_bias):
    """nn.Linear forward: x_flat (1, 14*P) @ W^T + b -> (1, 14)."""
    in_dim = x_flat.shape[1]
    out_dim = fc_weight.shape[0]
    w_t = jnp.transpose(fc_weight).astype(jnp.float32)    # (14*P, 14)
    b = fc_bias.reshape(1, out_dim).astype(jnp.float32)

    grid_spec = pltpu.PrefetchScalarGridSpec(
        num_scalar_prefetch=0,
        grid=(1,),
        in_specs=[
            pl.BlockSpec((1, in_dim), lambda i: (0, 0)),
            pl.BlockSpec((in_dim, out_dim), lambda i: (0, 0)),
            pl.BlockSpec((1, out_dim), lambda i: (0, 0)),
        ],
        out_specs=pl.BlockSpec((1, out_dim), lambda i: (0, 0)),
    )

    return pl.pallas_call(
        _fc_kernel,
        out_shape=jax.ShapeDtypeStruct((1, out_dim), jnp.float32),
        grid_spec=grid_spec,
        compiler_params=pltpu.CompilerParams(
            dimension_semantics=("arbitrary",)),
    )(x_flat.astype(jnp.float32), w_t, b)


def gcn_forward(x, adj, gc_weight, gc_bias, fc_weight=None, fc_bias=None,
                predict=False):
    """GCN.forward: predict=False returns (1, 14, P); predict=True returns (1, 14)."""
    gc_out = graph_conv_forward(x, adj, gc_weight, gc_bias)   # (1, 14, P)
    if not predict:
        return gc_out
    p_dim = gc_weight.shape[1]
    x_flat = gc_out.reshape(1, N_NODES * p_dim)
    return _fc_forward(x_flat, fc_weight, fc_bias)

# TODO(synk): BaseModel.save/load (torch checkpoint I/O) has no Pallas equivalent;
#             parameters are plain JAX arrays here.


if __name__ == "__main__":
    n_features, n_pred = 16, 2
    key = jax.random.PRNGKey(0)
    k_x, k_w, k_b, k_a, k_fw, k_fb = jax.random.split(key, 6)

    # Input as the module expects after x.view(1, 14, -1)
    x = jax.random.normal(k_x, (1, N_NODES, n_features), jnp.float32)

    # The torch module initializes weight/bias to zeros; use small random values
    # here so the kernel output is non-trivial.
    weight = 0.1 * jax.random.normal(k_w, (n_features, n_pred), jnp.float32)
    bias = 0.1 * jax.random.normal(k_b, (n_pred,), jnp.float32)

    # Random symmetric 0/1 adjacency with zero diagonal -> kernel adds self-loops.
    adj = (jax.random.uniform(k_a, (N_NODES, N_NODES)) > 0.5).astype(jnp.float32)
    adj = jnp.maximum(adj, adj.T)
    adj = adj * (1.0 - jnp.eye(N_NODES, dtype=jnp.float32))

    # ---- predict=False path (default GCN construction) ----
    out = gcn_forward(x, adj, weight, bias, predict=False)
    jax.block_until_ready(out)
    assert out.shape == (1, N_NODES, n_pred)

    # Plain-JAX reference check.
    a_ref = adj + jnp.eye(N_NODES, dtype=jnp.float32)
    ref = jnp.maximum(a_ref @ (x.reshape(N_NODES, n_features) @ weight), 0.0) + bias
    assert jnp.allclose(out[0], ref, atol=1e-2, rtol=1e-2)

    # ---- predict=True path (fc head) ----
    fc_w = 0.1 * jax.random.normal(k_fw, (14, 14 * n_pred), jnp.float32)  # torch (out, in)
    fc_b = 0.1 * jax.random.normal(k_fb, (14,), jnp.float32)
    out_pred = gcn_forward(x, adj, weight, bias, fc_w, fc_b, predict=True)
    jax.block_until_ready(out_pred)
    assert out_pred.shape == (1, 14)
    ref_pred = ref.reshape(1, -1) @ fc_w.T + fc_b
    assert jnp.allclose(out_pred, ref_pred, atol=1e-2, rtol=1e-2)

    print("KERNEL_OK")
</pallas_src>

<mosaic_0001>
module attributes {stable_mosaic.version = 11 : i64} {
  func.func @_graph_conv_kernel(%arg0: i32, %arg1: memref<14x16xf32, #tpu.memory_space<vmem>>, %arg2: memref<16x2xf32, #tpu.memory_space<vmem>>, %arg3: memref<14x14xf32, #tpu.memory_space<vmem>>, %arg4: memref<1x2xf32, #tpu.memory_space<vmem>>, %arg5: memref<14x2xf32, #tpu.memory_space<vmem>>) attributes {dimension_semantics = [#tpu.dimension_semantics<arbitrary>], iteration_bounds = array<i64: 1>, scalar_prefetch = 0 : i64, scratch_operands = 0 : i64, tpu.core_type = #tpu.core_type<tc>, window_params = [{pipeline_mode = #tpu.pipeline_mode<synchronous>, transform_indices = @transform_0, window_bounds = array<i64: 14, 16>}, {pipeline_mode = #tpu.pipeline_mode<synchronous>, transform_indices = @transform_1, window_bounds = array<i64: 16, 2>}, {pipeline_mode = #tpu.pipeline_mode<synchronous>, transform_indices = @transform_2, window_bounds = array<i64: 14, 14>}, {pipeline_mode = #tpu.pipeline_mode<synchronous>, transform_indices = @transform_3, window_bounds = array<i64: 1, 2>}, {pipeline_mode = #tpu.pipeline_mode<synchronous>, transform_indices = @transform_4, window_bounds = array<i64: 14, 2>}]} {
    %c0 = arith.constant 0 : index
    %c0_0 = arith.constant 0 : index
    %0 = vector.load %arg3[%c0, %c0_0] : memref<14x14xf32, #tpu.memory_space<vmem>>, vector<14x14xf32>
    %1 = tpu.iota {dimensions = array<i32: 0>} : vector<14x14xi32>
    %2 = tpu.iota {dimensions = array<i32: 1>} : vector<14x14xi32>
    %3 = arith.cmpi eq, %1, %2 : vector<14x14xi32>
    %4 = arith.extui %3 : vector<14x14xi1> to vector<14x14xi32>
    %5 = arith.sitofp %4 : vector<14x14xi32> to vector<14x14xf32>
    %c0_1 = arith.constant 0 : index
    %c0_2 = arith.constant 0 : index
    %6 = vector.load %arg3[%c0_1, %c0_2] : memref<14x14xf32, #tpu.memory_space<vmem>>, vector<1x1xf32>
    %cst = arith.constant 0.000000e+00 : f32
    %7 = vector.broadcast %cst : f32 to vector<1x1xf32>
    %8 = arith.cmpf oeq, %6, %7 : vector<1x1xf32>
    %9 = arith.addf %0, %5 : vector<14x14xf32>
    %10 = vector.shape_cast %8 : vector<1x1xi1> to vector<1x1xi1>
    %11 = vector.broadcast %10 : vector<1x1xi1> to vector<14x14xi1>
    %12 = arith.select %11, %9, %0 : vector<14x14xi1>, vector<14x14xf32>
    %c0_3 = arith.constant 0 : index
    %c0_4 = arith.constant 0 : index
    %13 = vector.load %arg1[%c0_3, %c0_4] : memref<14x16xf32, #tpu.memory_space<vmem>>, vector<14x16xf32>
    %c0_5 = arith.constant 0 : index
    %c0_6 = arith.constant 0 : index
    %14 = vector.load %arg2[%c0_5, %c0_6] : memref<16x2xf32, #tpu.memory_space<vmem>>, vector<16x2xf32>
    %cst_7 = arith.constant dense<0.000000e+00> : vector<14x2xf32>
    %15 = tpu.matmul %13, %14, %cst_7 {dimension_numbers = #tpu.dot_dimension_numbers<[1], [0], [0], [1], [0, 0, 1, 1], [], []>} : vector<14x16xf32>, vector<16x2xf32>, vector<14x2xf32> -> vector<14x2xf32>
    %cst_8 = arith.constant dense<0.000000e+00> : vector<14x2xf32>
    %16 = tpu.matmul %12, %15, %cst_8 {dimension_numbers = #tpu.dot_dimension_numbers<[1], [0], [0], [1], [0, 0, 1, 1], [], []>} : vector<14x14xf32>, vector<14x2xf32>, vector<14x2xf32> -> vector<14x2xf32>
    %cst_9 = arith.constant 0.000000e+00 : f32
    %17 = vector.broadcast %cst_9 : f32 to vector<14x2xf32>
    %18 = arith.maximumf %16, %17 : vector<14x2xf32>
    %c0_10 = arith.constant 0 : index
    %c0_11 = arith.constant 0 : index
    %19 = vector.load %arg4[%c0_10, %c0_11] : memref<1x2xf32, #tpu.memory_space<vmem>>, vector<1x2xf32>
    %20 = vector.broadcast %19 : vector<1x2xf32> to vector<14x2xf32>
    %21 = arith.addf %18, %20 : vector<14x2xf32>
    %c0_12 = arith.constant 0 : index
    %c0_13 = arith.constant 0 : index
    %22 = vector.load %arg5[%c0_12, %c0_13] : memref<14x2xf32, #tpu.memory_space<vmem>>, vector<14x2xf32>
    tpu.vector_store %arg5[%c0_12, %c0_13], %21 {strides = array<i32>} : memref<14x2xf32, #tpu.memory_space<vmem>>, vector<14x2xf32>,
    return
  }
  func.func @transform_0(%arg0: i32) -> (i32, i32) {
    %c0_i32 = arith.constant 0 : i32
    %c0_i32_0 = arith.constant 0 : i32
    %c0_i32_1 = arith.constant 0 : i32
    return %c0_i32, %c0_i32_0 : i32, i32
  }
  func.func @transform_1(%arg0: i32) -> (i32, i32) {
    %c0_i32 = arith.constant 0 : i32
    %c0_i32_0 = arith.constant 0 : i32
    %c0_i32_1 = arith.constant 0 : i32
    return %c0_i32, %c0_i32_0 : i32, i32
  }
  func.func @transform_2(%arg0: i32) -> (i32, i32) {
    %c0_i32 = arith.constant 0 : i32
    %c0_i32_0 = arith.constant 0 : i32
    %c0_i32_1 = arith.constant 0 : i32
    return %c0_i32, %c0_i32_0 : i32, i32
  }
  func.func @transform_3(%arg0: i32) -> (i32, i32) {
    %c0_i32 = arith.constant 0 : i32
    %c0_i32_0 = arith.constant 0 : i32
    %c0_i32_1 = arith.constant 0 : i32
    return %c0_i32, %c0_i32_0 : i32, i32
  }
  func.func @transform_4(%arg0: i32) -> (i32, i32) {
    %c0_i32 = arith.constant 0 : i32
    %c0_i32_0 = arith.constant 0 : i32
    %c0_i32_1 = arith.constant 0 : i32
    return %c0_i32, %c0_i32_0 : i32, i32
  }
}

</mosaic_0001>

<llo_original>
// kernel: graph_conv_forward.1
$region0: #{graph_conv_forward.1}
  #allocation0 [shape = 'u32[]', space=smem, size = 0x4, offset = 0x4, fixed_abs, tag = 'smem constant byte address 0x4 - core index']
  #allocation1 [shape = 'u32[144,128]{1,0:T(1,128)}', space=vmem, size = 0x12000, scoped, tag = 'internal scratch']
  %s0 = inlined_call_operand.vmem [shape: f32[14,16], index: 0, kind: input, shape index: {}]
  %s1 = inlined_call_operand.vmem [shape: f32[16,2], index: 1, kind: input, shape index: {}]
  %s2 = inlined_call_operand.vmem [shape: f32[14,14], index: 2, kind: input, shape index: {}]
  %s3 = inlined_call_operand.vmem [shape: f32[1,2], index: 3, kind: input, shape index: {}]
  %s4 = inlined_call_operand.vmem [shape: f32[14,2], index: 4, kind: output, shape index: {}]
  %s5 = sld [smem:[#allocation0]]
  $region26: #{graph_conv_forward.1} parent=0
    _
  %s7 = ssub.s32 1, %s5
  %s8 = scalar_select 0, %s7, %s5
  // Predicated region
  $region2: #{graph_conv_forward.1} parent=0 // pred_check
    _
  $region3: #{graph_conv_forward.1} parent=0 // pred_check_branch
    %10 = sbr.rel (0) target = $region5
  $region4: #{graph_conv_forward.1} parent=0 // pred_region
    _
  $region5: #{graph_conv_forward.1} parent=0 // pred_fallthru
    _
  // Predicated region
  $region6: #{graph_conv_forward.1} parent=0 // pred_check
    _
  $region7: #{graph_conv_forward.1} parent=0 // pred_check_branch
    %12 = sbr.rel (0) target = $region9
  $region8: #{graph_conv_forward.1} parent=0 // pred_region
    _
  $region9: #{graph_conv_forward.1} parent=0 // pred_fallthru
    _
  // Predicated region
  $region10: #{graph_conv_forward.1} parent=0 // pred_check
    _
  $region11: #{graph_conv_forward.1} parent=0 // pred_check_branch
    %14 = sbr.rel (0) target = $region13
  $region12: #{graph_conv_forward.1} parent=0 // pred_region
    _
  $region13: #{graph_conv_forward.1} parent=0 // pred_fallthru
    _
  // Predicated region
  $region14: #{graph_conv_forward.1} parent=0 // pred_check
    _
  $region15: #{graph_conv_forward.1} parent=0 // pred_check_branch
    %16 = sbr.rel (0) target = $region17
  $region16: #{graph_conv_forward.1} parent=0 // pred_region
    _
  $region17: #{graph_conv_forward.1} parent=0 // pred_fallthru
    _
  %v17 = vld [vmem:[%s2] sm:$0xff]
  %v18 = vld [vmem:[%s2 + $0x8] sm:$0x3f]
  %v19 = vlaneseq
  %v20 = vshrl.u32 %v19, 7
  %v21 = vadd.s32 %v20, 8
  %v22 = vlaneseq
  %v23 = vand.u32 %v22, 127
  %vm24 = vcmp.eq.s32.totalorder %v20, %v23
  %vm25 = vcmp.eq.s32.totalorder %v21, %v23
  %v26 = vsel %vm24, 1, 0
  %v27 = vsel %vm25, 1, 0
  %v28 = vcvt.s32.f32 %v26
  %v29 = vcvt.s32.f32 %v27
  %v30 = vld [vmem:[%s2] sm:$0x1]
  %vm31 = vcmp.eq.f32.partialorder %v30, 0.0
  %v32 = vadd.f32 %v17, %v28
  %v33 = vadd.f32 %v18, %v29
  %v34 = vsel %vm31, 1, 0
  %s35 = vtos %v34
  %v36 = vstv %s35
  %vm37 = vcmp.eq.s32.totalorder %v36, 1
  %v38 = vsel %vm37, %v32, %v17
  %v39 = vsel %vm37, %v33, %v18
  %v40 = vld [vmem:[%s0] sm:$0xff]
  %v41 = vld [vmem:[%s0 + $0x8] sm:$0x3f]
  %v42 = vld [vmem:[%s1] sm:$0xff]
  %v43 = vld [vmem:[%s1 + $0x8] sm:$0xff]
  %vm44 = vcmask 130048
  %v46 = vsel %vm44, %v40, 0
  %v49 = vsel %vm44, %v41, 0
  %51 = vmatprep.subr.mxu0 0.0
  %52 = vmatpush1.msra.mxu0 %v42
  %53 = vmatprep.subr.mxu0 0.0
  %54 = vmatpush1.msra.mxu0 %v43
  %55 = vmatprep.subr.mxu0 0.0
  %56 = vmatpush1.msra.mxu0 0.0
  %57 = vmatprep.subr.mxu0 0.0
  %58 = vmatpush1.msra.mxu0 0.0
  %59 = vmatprep.subr.mxu0 0.0
  %60 = vmatpush1.msra.mxu0 0.0
  %61 = vmatprep.subr.mxu0 0.0
  %62 = vmatpush1.msra.mxu0 0.0
  %63 = vmatprep.subr.mxu0 0.0
  %64 = vmatpush1.msra.mxu0 0.0
  %65 = vmatprep.subr.mxu0 0.0
  %66 = vmatpush1.msra.mxu0 0.0
  %67 = vmatprep.subr.mxu0 0.0
  %68 = vmatpush1.msra.mxu0 0.0
  %69 = vmatprep.subr.mxu0 0.0
  %70 = vmatpush1.msra.mxu0 0.0
  %71 = vmatprep.subr.mxu0 0.0
  %72 = vmatpush1.msra.mxu0 0.0
  %73 = vmatprep.subr.mxu0 0.0
  %74 = vmatpush1.msra.mxu0 0.0
  %75 = vmatprep.subr.mxu0 0.0
  %76 = vmatpush1.msra.mxu0 0.0
  %77 = vmatprep.subr.mxu0 0.0
  %78 = vmatpush1.msra.mxu0 0.0
  %79 = vmatprep.subr.mxu0 0.0
  %80 = vmatpush1.msra.mxu0 0.0
  %81 = vmatprep.subr.mxu0 0.0
  %82 = vmatpush1.msra.mxu0 0.0
  %83 = vmatprep.subr.mxu0 0.0
  %84 = vmatpush1.msra.mxu0 0.0
  %85 = vmatprep.subr.mxu0 0.0
  %86 = vmatpush1.msra.mxu0 0.0
  %87 = vmatprep.subr.mxu0 0.0
  %88 = vmatpush1.msra.mxu0 0.0
  %89 = vmatprep.subr.mxu0 0.0
  %90 = vmatpush1.msra.mxu0 0.0
  %91 = vmatprep.subr.mxu0 0.0
  %92 = vmatpush1.msra.mxu0 0.0
  %93 = vmatprep.subr.mxu0 0.0
  %94 = vmatpush1.msra.mxu0 0.0
  %95 = vmatprep.subr.mxu0 0.0
  %96 = vmatpush1.msra.mxu0 0.0
  %97 = vmatprep.subr.mxu0 0.0
  %98 = vmatpush1.msra.mxu0 0.0
  %99 = vmatprep.subr.mxu0 0.0
  %100 = vmatpush1.msra.mxu0 0.0
  %101 = vmatprep.subr.mxu0 0.0
  %102 = vmatpush1.msra.mxu0 0.0
  %103 = vmatprep.subr.mxu0 0.0
  %104 = vmatpush1.msra.mxu0 0.0
  %105 = vmatprep.subr.mxu0 0.0
  %106 = vmatpush1.msra.mxu0 0.0
  %107 = vmatprep.subr.mxu0 0.0
  %108 = vmatpush1.msra.mxu0 0.0
  %109 = vmatprep.subr.mxu0 0.0
  %110 = vmatpush1.msra.mxu0 0.0
  %111 = vmatprep.subr.mxu0 0.0
  %112 = vmatpush1.msra.mxu0 0.0
  %113 = vmatprep.subr.mxu0 0.0
  %114 = vmatpush1.msra.mxu0 0.0
  %115 = vmatprep.mubr.f32.mxu0 0.0
  %116 = vmatmul.mubr.f32.gmra.mrb[0].mxu0 %v46
  %v117 = vpop.f32.mrb[0].mxu0
  %v118 = vadd.f32 0.0, %v117
  %v119 = vpop.f32.mrb[0].mxu0
  %120 = vmatprep.mubr.f32.mxu0 0.0
  %121 = vmatmul.mubr.f32.gmra.mrb[0].mxu0 %v49
  %v122 = vpop.f32.mrb[0].mxu0
  %v123 = vadd.f32 0.0, %v122
  %v124 = vpop.f32.mrb[0].mxu0
  %125 = vdwg.mxu0
  %vm126 = vcmask 113664
  %v128 = vsel %vm126, %v38, 0
  %v131 = vsel %vm126, %v39, 0
  %vm133 = vcmask 1045504
  %v135 = vsel %vm133, %v123, 0
  %137 = vmatprep.subr.mxu0 0.0
  %138 = vmatpush1.msra.mxu0 %v118
  %139 = vmatprep.subr.mxu0 0.0
  %140 = vmatpush1.msra.mxu0 %v135
  %141 = vmatprep.subr.mxu0 0.0
  %142 = vmatpush1.msra.mxu0 0.0
  %143 = vmatprep.subr.mxu0 0.0
  %144 = vmatpush1.msra.mxu0 0.0
  %145 = vmatprep.subr.mxu0 0.0
  %146 = vmatpush1.msra.mxu0 0.0
  %147 = vmatprep.subr.mxu0 0.0
  %148 = vmatpush1.msra.mxu0 0.0
  %149 = vmatprep.subr.mxu0 0.0
  %150 = vmatpush1.msra.mxu0 0.0
  %151 = vmatprep.subr.mxu0 0.0
  %152 = vmatpush1.msra.mxu0 0.0
  %153 = vmatprep.subr.mxu0 0.0
  %154 = vmatpush1.msra.mxu0 0.0
  %155 = vmatprep.subr.mxu0 0.0
  %156 = vmatpush1.msra.mxu0 0.0
  %157 = vmatprep.subr.mxu0 0.0
  %158 = vmatpush1.msra.mxu0 0.0
  %159 = vmatprep.subr.mxu0 0.0
  %160 = vmatpush1.msra.mxu0 0.0
  %161 = vmatprep.subr.mxu0 0.0
  %162 = vmatpush1.msra.mxu0 0.0
  %163 = vmatprep.subr.mxu0 0.0
  %164 = vmatpush1.msra.mxu0 0.0
  %165 = vmatprep.subr.mxu0 0.0
  %166 = vmatpush1.msra.mxu0 0.0
  %167 = vmatprep.subr.mxu0 0.0
  %168 = vmatpush1.msra.mxu0 0.0
  %169 = vmatprep.subr.mxu0 0.0
  %170 = vmatpush1.msra.mxu0 0.0
  %171 = vmatprep.subr.mxu0 0.0
  %172 = vmatpush1.msra.mxu0 0.0
  %173 = vmatprep.subr.mxu0 0.0
  %174 = vmatpush1.msra.mxu0 0.0
  %175 = vmatprep.subr.mxu0 0.0
  %176 = vmatpush1.msra.mxu0 0.0
  %177 = vmatprep.subr.mxu0 0.0
  %178 = vmatpush1.msra.mxu0 0.0
  %179 = vmatprep.subr.mxu0 0.0
  %180 = vmatpush1.msra.mxu0 0.0
  %181 = vmatprep.subr.mxu0 0.0
  %182 = vmatpush1.msra.mxu0 0.0
  %183 = vmatprep.subr.mxu0 0.0
  %184 = vmatpush1.msra.mxu0 0.0
  %185 = vmatprep.subr.mxu0 0.0
  %186 = vmatpush1.msra.mxu0 0.0
  %187 = vmatprep.subr.mxu0 0.0
  %188 = vmatpush1.msra.mxu0 0.0
  %189 = vmatprep.subr.mxu0 0.0
  %190 = vmatpush1.msra.mxu0 0.0
  %191 = vmatprep.subr.mxu0 0.0
  %192 = vmatpush1.msra.mxu0 0.0
  %193 = vmatprep.subr.mxu0 0.0
  %194 = vmatpush1.msra.mxu0 0.0
  %195 = vmatprep.subr.mxu0 0.0
  %196 = vmatpush1.msra.mxu0 0.0
  %197 = vmatprep.subr.mxu0 0.0
  %198 = vmatpush1.msra.mxu0 0.0
  %199 = vmatprep.subr.mxu0 0.0
  %200 = vmatpush1.msra.mxu0 0.0
  %201 = vmatprep.mubr.f32.mxu0 0.0
  %202 = vmatmul.mubr.f32.gmra.mrb[0].mxu0 %v128
  %v203 = vpop.f32.mrb[0].mxu0
  %v204 = vadd.f32 0.0, %v203
  %v205 = vpop.f32.mrb[0].mxu0
  %206 = vmatprep.mubr.f32.mxu0 0.0
  %207 = vmatmul.mubr.f32.gmra.mrb[0].mxu0 %v131
  %v208 = vpop.f32.mrb[0].mxu0
  %v209 = vadd.f32 0.0, %v208
  %v210 = vpop.f32.mrb[0].mxu0
  %211 = vdwg.mxu0
  %v212 = vmax.f32 %v204, 0.0
  %v213 = vmax.f32 %v209, 0.0
  %v214 = vld [vmem:[%s3] sm:$0x1]
  %v216 = vlaneseq
  %v217 = vshrl.u32 %v216, 7
  %v218 = vsub.s32 0, %v217
  %v219 = vrot.slane %v214, %v218
  %v221 = vadd.f32 %v212, %v219
  %v222 = vadd.f32 %v213, %v219
  %vm223 = vcmask 15360
  %224 = vst.msk [vmem:[%s4] sm:$0xff] %vm223, %v221
  %vm225 = vcmask 13312
  %226 = vst.msk [vmem:[%s4 + $0x8] sm:$0x3f] %vm225, %v222
  // Predicated region
  $region18: #{graph_conv_forward.1} parent=0 // pred_check
    _
  $region19: #{graph_conv_forward.1} parent=0 // pred_check_branch
    %228 = sbr.rel (0) target = $region21
  $region20: #{graph_conv_forward.1} parent=0 // pred_region
    _
  $region21: #{graph_conv_forward.1} parent=0 // pred_fallthru
    _
  // Predicated region
  $region22: #{graph_conv_forward.1} parent=0 // pred_check
    _
  $region23: #{graph_conv_forward.1} parent=0 // pred_check_branch
    %230 = sbr.rel (0) target = $region25
  $region24: #{graph_conv_forward.1} parent=0 // pred_region
    _
  $region25: #{graph_conv_forward.1} parent=0 // pred_fallthru
    _

</llo_original>
